<compile_context>
chip_gen: v7x
topology: tpu7x:2x2x1
jax: 0.10.0
libtpu: 0.0.40
codegen_flags: <defaults>
</compile_context>

<pallas_src>
import dataclasses

import jax
import jax.numpy as jnp
from jax.experimental import pallas as pl
from jax.experimental.pallas import tpu as pltpu


# ---------------------------------------------------------------------------
# Hardware queries
# ---------------------------------------------------------------------------
def _round_up(x, m):
    return ((x + m - 1) // m) * m


def _vmem_capacity_bytes():
    try:
        cap = getattr(pltpu.get_tpu_info(), "vmem_capacity_bytes", None)
        if cap:
            return int(cap)
    except Exception:
        pass
    return 64 << 20  # conservative (v7x-sized) default


def _is_v7x():
    try:
        kind = jax.devices()[0].device_kind.lower()
        return ("v7" in kind) or ("7x" in kind)
    except Exception:
        return False


# ---------------------------------------------------------------------------
# Kernel
# ---------------------------------------------------------------------------
def _mlp_kernel(x_ref, w1t_ref, b1_ref, w2t_ref, b2_ref, o_ref):
    # Linear 1 on the MXU: cast the activation tile to the weight dtype (bf16)
    # only at the matmul input; accumulate in f32.
    h = jnp.dot(x_ref[...].astype(w1t_ref.dtype), w1t_ref[...],
                preferred_element_type=jnp.float32)
    # Dropout(0.5) is identity in eval mode; bias add + ReLU stay in f32 (VPU).
    h = jnp.maximum(h + b1_ref[...], 0.0)
    # Linear 2 on the MXU, f32 accumulation.
    out = jnp.dot(h.astype(w2t_ref.dtype), w2t_ref[...],
                  preferred_element_type=jnp.float32)
    o_ref[...] = (out + b2_ref[...]).astype(o_ref.dtype)


# ---------------------------------------------------------------------------
# Parameters (transpose / cast / lane-pad ONCE, not per forward call)
# ---------------------------------------------------------------------------
@dataclasses.dataclass(frozen=True)
class MLPParams:
    w1t: jax.Array   # (Dp, Hp)  compute dtype (bf16 by default)
    b1: jax.Array    # (1, Hp)   f32
    w2t: jax.Array   # (Hp, Op)  compute dtype
    b2: jax.Array    # (1, Op)   f32
    D: int
    H: int
    O: int
    Dp: int
    Hp: int
    Op: int


def make_mlp_params(w1, b1, w2, b2, *, compute_dtype=jnp.bfloat16):
    """w1:(H,D) b1:(H,) w2:(O,H) b2:(O,) in PyTorch Linear layout."""
    H, D = w1.shape
    O = w2.shape[0]
    Dp, Hp, Op = _round_up(D, 128), _round_up(H, 128), _round_up(O, 128)
    # Zero-padding is exact: padded input columns hit zero weight rows, padded
    # hidden units have zero bias -> ReLU(0)=0 -> zero contribution downstream.
    w1t = jnp.zeros((Dp, Hp), compute_dtype).at[:D, :H].set(
        w1.T.astype(compute_dtype))
    w2t = jnp.zeros((Hp, Op), compute_dtype).at[:H, :O].set(
        w2.T.astype(compute_dtype))
    b1p = jnp.zeros((1, Hp), jnp.float32).at[0, :H].set(b1.astype(jnp.float32))
    b2p = jnp.zeros((1, Op), jnp.float32).at[0, :O].set(b2.astype(jnp.float32))
    return MLPParams(w1t=w1t, b1=b1p, w2t=w2t, b2=b2p,
                     D=D, H=H, O=O, Dp=Dp, Hp=Hp, Op=Op)


# ---------------------------------------------------------------------------
# Block sizing
# ---------------------------------------------------------------------------
def _pick_block_m(B, Dp, Hp, Op, budget_bytes, act_bytes, w_bytes):
    """Largest multiple-of-8 batch tile fitting the VMEM budget."""
    # Single-buffered resident weights (constant index_map) + f32 biases.
    resident = w_bytes * (Dp * Hp + Hp * Op) + 4 * (Hp + Op)
    # Per streamed row: double-buffered x tile + double-buffered f32 output
    # tile + f32 hidden activations live during compute.
    per_row = 2 * act_bytes * Dp + 2 * 4 * Op + 4 * Hp
    avail = max(budget_bytes - resident, per_row * 8)
    tm = int(avail // per_row)
    tm = max(8, min(1024, (tm // 8) * 8))
    tm = min(tm, max(8, _round_up(B, 8)))
    return tm


# ---------------------------------------------------------------------------
# Forward
# ---------------------------------------------------------------------------
def mlp_forward(x, params: MLPParams, *, block_m=None, use_pallas=True):
    """Fused MLP forward (eval-mode dropout). x: (B, D); returns (B, O)."""
    B, D = x.shape
    assert D == params.D, "input feature dim mismatch"
    Dp, Hp, Op = params.Dp, params.Hp, params.Op
    out_dtype = x.dtype

    # Lane-pad the input feature dim (free when D is already 128-aligned).
    xp = x if D == Dp else jnp.pad(x, ((0, 0), (0, Dp - D)))

    w_bytes = params.w1t.dtype.itemsize
    a_bytes = xp.dtype.itemsize
    o_bytes = jnp.dtype(out_dtype).itemsize
    resident_bytes = w_bytes * (Dp * Hp + Hp * Op) + 4 * (Hp + Op)

    cap = _vmem_capacity_bytes()
    vmem_limit = min(int(cap * 3 // 4), 100 << 20)   # ~96 MiB v5e/v6e, ~48 MiB v7x

    # TODO(synk): K-tiled (contraction-dim) accumulator schedule for weights
    # larger than the VMEM budget; for now fall back to plain XLA (correct,
    # just not a Pallas kernel).  `use_pallas=False` also lets callers skip
    # Pallas for genuinely sub-vreg problems.
    if (not use_pallas) or (2 * resident_bytes > vmem_limit):
        h = jnp.maximum(
            jnp.dot(xp.astype(params.w1t.dtype), params.w1t,
                    preferred_element_type=jnp.float32) + params.b1, 0.0)
        out = jnp.dot(h.astype(params.w2t.dtype), params.w2t,
                      preferred_element_type=jnp.float32) + params.b2
        return out[:, :params.O].astype(out_dtype)

    cost = pl.CostEstimate(
        flops=2 * B * (Dp * Hp + Hp * Op),
        transcendentals=0,
        bytes_accessed=(a_bytes * B * Dp + w_bytes * (Dp * Hp + Hp * Op)
                        + 4 * (Hp + Op) + o_bytes * B * Op),
    )

    total_bytes = (a_bytes * B * Dp + resident_bytes
                   + 4 * B * Hp + o_bytes * B * Op)

    if block_m is None and total_bytes <= (8 << 20):
        # ---- Small-problem path: single invocation, everything VMEM-resident,
        #      no grid / pipeline machinery at all.
        out = pl.pallas_call(
            _mlp_kernel,
            out_shape=jax.ShapeDtypeStruct((B, Op), out_dtype),
            in_specs=[pl.BlockSpec(memory_space=pltpu.MemorySpace.VMEM)] * 5,
            out_specs=pl.BlockSpec(memory_space=pltpu.MemorySpace.VMEM),
            cost_estimate=cost,
        )(xp, params.w1t, params.b1, params.w2t, params.b2)
        return out[:, :params.O]

    # ---- Batch-tiled path: stream activation tiles, keep weights resident.
    tm = block_m if block_m is not None else _pick_block_m(
        B, Dp, Hp, Op, vmem_limit - (4 << 20), a_bytes, w_bytes)
    grid = (pl.cdiv(B, tm),)

    def _resident_spec(shape):
        # Constant index_map -> block never changes; single-buffer it to halve
        # resident VMEM.  Fall back gracefully if the kwarg is unavailable.
        try:
            return pl.BlockSpec(shape, lambda i: (0, 0),
                                pipeline_mode=pl.Buffered(1))
        except (TypeError, AttributeError):
            return pl.BlockSpec(shape, lambda i: (0, 0))

    def _build(dim_sem, single_buffer):
        make_w = (_resident_spec if single_buffer
                  else (lambda s: pl.BlockSpec(s, lambda i: (0, 0))))
        return pl.pallas_call(
            _mlp_kernel,
            out_shape=jax.ShapeDtypeStruct((B, Op), out_dtype),
            grid_spec=pl.GridSpec(
                grid=grid,
                in_specs=[
                    pl.BlockSpec((tm, Dp), lambda i: (i, 0)),  # x tile, streamed
                    make_w((Dp, Hp)),                          # W1^T, resident
                    make_w((1, Hp)),                           # b1,   resident
                    make_w((Hp, Op)),                          # W2^T, resident
                    make_w((1, Op)),                           # b2,   resident
                ],
                out_specs=pl.BlockSpec((tm, Op), lambda i: (i, 0)),
            ),
            compiler_params=pltpu.CompilerParams(
                dimension_semantics=dim_sem,
                vmem_limit_bytes=vmem_limit,
            ),
            cost_estimate=cost,
        )

    attempts = [
        # Preferred: core-parallel batch axis on v7x (both TensorCores),
        # single-buffered resident weights.
        ((pltpu.CORE_PARALLEL,) if _is_v7x() else ("parallel",), True),
        # Conservative fallback if the preferred knobs are rejected.
        (("parallel",), False),
    ]
    last_err = None
    for dim_sem, single_buffer in attempts:
        try:
            out = _build(dim_sem, single_buffer)(
                xp, params.w1t, params.b1, params.w2t, params.b2)
            return out[:, :params.O]
        except Exception as e:  # compile-time fallback only
            last_err = e
    raise last_err


# ---------------------------------------------------------------------------
# Reference / init / self-test
# ---------------------------------------------------------------------------
def _init_linear(key, out_features, in_features):
    # Mirrors PyTorch's default Linear init: U(-1/sqrt(fan_in), 1/sqrt(fan_in)).
    kw, kb = jax.random.split(key)
    bound = 1.0 / jnp.sqrt(jnp.float32(in_features))
    w = jax.random.uniform(kw, (out_features, in_features), jnp.float32,
                           minval=-bound, maxval=bound)
    b = jax.random.uniform(kb, (out_features,), jnp.float32,
                           minval=-bound, maxval=bound)
    return w, b


def _reference(x, w1, b1, w2, b2):
    # Eval-mode dropout == identity.
    return jnp.maximum(x @ w1.T + b1, 0.0) @ w2.T + b2


if __name__ == "__main__":
    key = jax.random.PRNGKey(0)
    k_small, k_big = jax.random.split(key)

    # ---- 1) Module-implied small shapes: input=32 -> hidden=16 -> output=8,
    #         batch=8.  Lane-padded to 128 inside the wrapper so stores are
    #         dense; exercises the single-block VMEM-resident path.
    input_size, output_size, batch = 32, 8, 8
    hidden = input_size // 2
    kx, k1, k2 = jax.random.split(k_small, 3)
    x = jax.random.normal(kx, (batch, input_size), jnp.float32)
    w1, b1 = _init_linear(k1, hidden, input_size)
    w2, b2 = _init_linear(k2, output_size, hidden)
    params = make_mlp_params(w1, b1, w2, b2)

    out = jax.block_until_ready(mlp_forward(x, params))
    ref = _reference(x, w1, b1, w2, b2)
    assert out.shape == (batch, output_size)
    assert jnp.allclose(out, ref, atol=2e-2, rtol=2e-2), "small-path mismatch"

    # ---- 2) Batch-tiled grid path (lane-aligned dims, TM=128 -> 8 grid steps),
    #         bf16 weights resident / single-buffered, activations streamed.
    D2, O2, B2 = 512, 256, 1024
    H2 = D2 // 2
    kx2, k12, k22 = jax.random.split(k_big, 3)
    x2 = jax.random.normal(kx2, (B2, D2), jnp.float32)
    w1b, b1b = _init_linear(k12, H2, D2)
    w2b, b2b = _init_linear(k22, O2, H2)
    params2 = make_mlp_params(w1b, b1b, w2b, b2b)

    out2 = jax.block_until_ready(mlp_forward(x2, params2, block_m=128))
    ref2 = _reference(x2, w1b, b1b, w2b, b2b)
    assert out2.shape == (B2, O2)
    assert jnp.allclose(out2, ref2, atol=6e-2, rtol=6e-2), "tiled-path mismatch"

    print("KERNEL_OK")
</pallas_src>

<mosaic_0001>
module attributes {stable_mosaic.version = 11 : i64} {
  func.func @_mlp_kernel(%arg0: memref<8x128xf32, #tpu.memory_space<vmem>>, %arg1: memref<128x128xbf16, #tpu.memory_space<vmem>>, %arg2: memref<1x128xf32, #tpu.memory_space<vmem>>, %arg3: memref<128x128xbf16, #tpu.memory_space<vmem>>, %arg4: memref<1x128xf32, #tpu.memory_space<vmem>>, %arg5: memref<8x128xf32, #tpu.memory_space<vmem>>) attributes {dimension_semantics = [], scalar_prefetch = 0 : i64, scratch_operands = 0 : i64, tpu.core_type = #tpu.core_type<tc>} {
    %c0 = arith.constant 0 : index
    %c0_0 = arith.constant 0 : index
    %0 = vector.load %arg0[%c0, %c0_0] : memref<8x128xf32, #tpu.memory_space<vmem>>, vector<8x128xf32>
    %1 = arith.truncf %0 : vector<8x128xf32> to vector<8x128xbf16>
    %c0_1 = arith.constant 0 : index
    %c0_2 = arith.constant 0 : index
    %2 = vector.load %arg1[%c0_1, %c0_2] : memref<128x128xbf16, #tpu.memory_space<vmem>>, vector<128x128xbf16>
    %cst = arith.constant dense<0.000000e+00> : vector<8x128xf32>
    %3 = tpu.matmul %1, %2, %cst {dimension_numbers = #tpu.dot_dimension_numbers<[1], [0], [0], [1], [0, 0, 1, 1], [], []>} : vector<8x128xbf16>, vector<128x128xbf16>, vector<8x128xf32> -> vector<8x128xf32>
    %c0_3 = arith.constant 0 : index
    %c0_4 = arith.constant 0 : index
    %4 = vector.load %arg2[%c0_3, %c0_4] : memref<1x128xf32, #tpu.memory_space<vmem>>, vector<1x128xf32>
    %5 = vector.broadcast %4 : vector<1x128xf32> to vector<8x128xf32>
    %6 = arith.addf %3, %5 : vector<8x128xf32>
    %cst_5 = arith.constant 0.000000e+00 : f32
    %7 = vector.broadcast %cst_5 : f32 to vector<8x128xf32>
    %8 = arith.maximumf %6, %7 : vector<8x128xf32>
    %9 = arith.truncf %8 : vector<8x128xf32> to vector<8x128xbf16>
    %c0_6 = arith.constant 0 : index
    %c0_7 = arith.constant 0 : index
    %10 = vector.load %arg3[%c0_6, %c0_7] : memref<128x128xbf16, #tpu.memory_space<vmem>>, vector<128x128xbf16>
    %cst_8 = arith.constant dense<0.000000e+00> : vector<8x128xf32>
    %11 = tpu.matmul %9, %10, %cst_8 {dimension_numbers = #tpu.dot_dimension_numbers<[1], [0], [0], [1], [0, 0, 1, 1], [], []>} : vector<8x128xbf16>, vector<128x128xbf16>, vector<8x128xf32> -> vector<8x128xf32>
    %c0_9 = arith.constant 0 : index
    %c0_10 = arith.constant 0 : index
    %12 = vector.load %arg4[%c0_9, %c0_10] : memref<1x128xf32, #tpu.memory_space<vmem>>, vector<1x128xf32>
    %13 = vector.broadcast %12 : vector<1x128xf32> to vector<8x128xf32>
    %14 = arith.addf %11, %13 : vector<8x128xf32>
    %c0_11 = arith.constant 0 : index
    %c0_12 = arith.constant 0 : index
    %15 = vector.load %arg5[%c0_11, %c0_12] : memref<8x128xf32, #tpu.memory_space<vmem>>, vector<8x128xf32>
    tpu.vector_store %arg5[%c0_11, %c0_12], %14 {strides = array<i32>} : memref<8x128xf32, #tpu.memory_space<vmem>>, vector<8x128xf32>,
    return
  }
}

</mosaic_0001>

<llo_original>
// kernel: tpu_custom_call.1
$region0: #{tpu_custom_call.1}
  #allocation0 [shape = 'u32[]', space=smem, size = 0x4, offset = 0x4, fixed_abs, tag = 'smem constant byte address 0x4 - core index']
  #allocation1 [shape = 'u32[144,128]{1,0:T(1,128)}', space=vmem, size = 0x12000, scoped, tag = 'internal scratch']
  %s0 = inlined_call_operand.hbm [shape: f32[8,128], index: 0, kind: input, shape index: {}]
  %s1 = inlined_call_operand.hbm [shape: bf16[128,128], index: 1, kind: input, shape index: {}]
  %s2 = inlined_call_operand.vmem [shape: f32[1,128], index: 2, kind: input, shape index: {}]
  %s3 = inlined_call_operand.hbm [shape: bf16[128,128], index: 3, kind: input, shape index: {}]
  %s4 = inlined_call_operand.vmem [shape: f32[1,128], index: 4, kind: input, shape index: {}]
  %s5 = inlined_call_operand.hbm [shape: f32[8,128], index: 5, kind: output, shape index: {}]
  %s6 = sld [smem:[#allocation0]]
  $region42: #{tpu_custom_call.1} parent=0
    _
  %s8 = ssub.s32 1, %s6
  %s9 = scalar_select 0, %s8, %s6
  $region1: #{tpu_custom_call.1} parent=0
    #allocation2 [shape = 'u8[4096]{0}', space=vmem, size = 0x1000, scoped, tag = 'input window, operand 0, single buffered']
    #allocation3 [shape = 's32[1]{0}', space=sflag, size = 0x4, scoped, tag = 'scoped memory for tpu_custom_call.1']
    #allocation4 [shape = 's32[1]{0}', space=sflag, size = 0x4, scoped, tag = 'scoped memory for tpu_custom_call.1']
    #allocation5 [shape = 'u8[32768]{0}', space=vmem, size = 0x8000, scoped, tag = 'input window, operand 1, single buffered']
    #allocation6 [shape = 's32[1]{0}', space=sflag, size = 0x4, scoped, tag = 'scoped memory for tpu_custom_call.1']
    #allocation7 [shape = 'u8[32768]{0}', space=vmem, size = 0x8000, scoped, tag = 'input window, operand 3, single buffered']
    #allocation8 [shape = 'u8[4096]{0}', space=vmem, size = 0x1000, scoped, tag = 'output window, operand 0, single buffered']
    %10 = vsyncpa [#allocation3], 0
    %11 = vsyncpa [#allocation6], 0
    %12 = vsyncpa [#allocation4], 0
    // Predicated region
    $region2: #{tpu_custom_call.1} parent=1 // pred_check
      _
    $region3: #{tpu_custom_call.1} parent=1 // pred_check_branch
      %14 = sbr.rel (0) target = $region5
    $region4: #{tpu_custom_call.1} parent=1 // pred_region
      %s16 = ssub.s32 128, 128
      %17 = vsyncadd [#allocation3], %s16
      %s19 = sshll.u32 [#allocation2], 4
      %s20 = int_to_ptr.vmem [resolvable:$true] %s19
      %22 = dma.hbm_to_vmem [thread:$0]  %s0, 128, %s20, [#allocation3]
    $region5: #{tpu_custom_call.1} parent=1 // pred_fallthru
      _
    // Predicated region
    $region6: #{tpu_custom_call.1} parent=1 // pred_check
      _
    $region7: #{tpu_custom_call.1} parent=1 // pred_check_branch
      %24 = sbr.rel (0) target = $region9
    $region8: #{tpu_custom_call.1} parent=1 // pred_region
      %s26 = ssub.s32 1024, 1024
      %27 = vsyncadd [#allocation6], %s26
      %s28 = sshll.u32 [#allocation5], 4
      %s29 = int_to_ptr.vmem [resolvable:$true] %s28
      %34 = dma.hbm_to_vmem [thread:$0]  %s1, 1024, %s29, [#allocation6], 64, 64, 4
    $region9: #{tpu_custom_call.1} parent=1 // pred_fallthru
      _
    // Predicated region
    $region10: #{tpu_custom_call.1} parent=1 // pred_check
      _
    $region11: #{tpu_custom_call.1} parent=1 // pred_check_branch
      %36 = sbr.rel (0) target = $region13
    $region12: #{tpu_custom_call.1} parent=1 // pred_region
      _
    $region13: #{tpu_custom_call.1} parent=1 // pred_fallthru
      _
    // Predicated region
    $region14: #{tpu_custom_call.1} parent=1 // pred_check
      _
    $region15: #{tpu_custom_call.1} parent=1 // pred_check_branch
      %38 = sbr.rel (0) target = $region17
    $region16: #{tpu_custom_call.1} parent=1 // pred_region
      %s40 = ssub.s32 1024, 1024
      %41 = vsyncadd [#allocation6], %s40
      %s42 = sshll.u32 [#allocation7], 4
      %s43 = int_to_ptr.vmem [resolvable:$true] %s42
      %48 = dma.hbm_to_vmem [thread:$0]  %s3, 1024, %s43, [#allocation6], 64, 64, 4
    $region17: #{tpu_custom_call.1} parent=1 // pred_fallthru
      _
    // Predicated region
    $region18: #{tpu_custom_call.1} parent=1 // pred_check
      _
    $region19: #{tpu_custom_call.1} parent=1 // pred_check_branch
      %50 = sbr.rel (0) target = $region21
    $region20: #{tpu_custom_call.1} parent=1 // pred_region
      _
    $region21: #{tpu_custom_call.1} parent=1 // pred_fallthru
      _
    // Predicated region
    $region22: #{tpu_custom_call.1} parent=1 // pred_check
      _
    $region23: #{tpu_custom_call.1} parent=1 // pred_check_branch
      %52 = sbr.rel (0) target = $region25
    $region24: #{tpu_custom_call.1} parent=1 // pred_region
      %53 = dma.done [#allocation3], 128
    $region25: #{tpu_custom_call.1} parent=1 // pred_fallthru
      _
    // Predicated region
    $region26: #{tpu_custom_call.1} parent=1 // pred_check
      _
    $region27: #{tpu_custom_call.1} parent=1 // pred_check_branch
      %55 = sbr.rel (0) target = $region29
    $region28: #{tpu_custom_call.1} parent=1 // pred_region
      %56 = dma.done [#allocation6], 1024
    $region29: #{tpu_custom_call.1} parent=1 // pred_fallthru
      _
    // Predicated region
    $region30: #{tpu_custom_call.1} parent=1 // pred_check
      _
    $region31: #{tpu_custom_call.1} parent=1 // pred_check_branch
      %58 = sbr.rel (0) target = $region33
    $region32: #{tpu_custom_call.1} parent=1 // pred_region
      %59 = dma.done [#allocation6], 1024
    $region33: #{tpu_custom_call.1} parent=1 // pred_fallthru
      _
    %v61 = vld [vmem:[#allocation2] sm:$0xff]
    %v62 = vpack.c.bf16 %v61, %v61
    %v63 = vld [vmem:[#allocation5] sm:$0xf]
    %v64 = vld [vmem:[#allocation5 + $0x4] sm:$0xf]
    %v65 = vld [vmem:[#allocation5 + $0x8] sm:$0xf]
    %v66 = vld [vmem:[#allocation5 + $0xc] sm:$0xf]
    %v67 = vld [vmem:[#allocation5 + $0x10] sm:$0xf]
    %v68 = vld [vmem:[#allocation5 + $0x14] sm:$0xf]
    %v69 = vld [vmem:[#allocation5 + $0x18] sm:$0xf]
    %v70 = vld [vmem:[#allocation5 + $0x1c] sm:$0xf]
    %v71 = vld [vmem:[#allocation5 + $0x20] sm:$0xf]
    %v72 = vld [vmem:[#allocation5 + $0x24] sm:$0xf]
    %v73 = vld [vmem:[#allocation5 + $0x28] sm:$0xf]
    %v74 = vld [vmem:[#allocation5 + $0x2c] sm:$0xf]
    %v75 = vld [vmem:[#allocation5 + $0x30] sm:$0xf]
    %v76 = vld [vmem:[#allocation5 + $0x34] sm:$0xf]
    %v77 = vld [vmem:[#allocation5 + $0x38] sm:$0xf]
    %v78 = vld [vmem:[#allocation5 + $0x3c] sm:$0xf]
    %v79 = vld [vmem:[%s2] sm:$0x1]
    %v81 = vlaneseq
    %v82 = vshrl.u32 %v81, 7
    %v83 = vsub.s32 0, %v82
    %v84 = vrot.slane %v79, %v83
    %v102 = vunpack.c.l.b16 %v63
    %v103 = vunpack.c.l.b16 %v64
    %v104 = vunpack.c.l.b16 %v65
    %v105 = vunpack.c.l.b16 %v66
    %v106 = vunpack.c.l.b16 %v67
    %v107 = vunpack.c.l.b16 %v68
    %v108 = vunpack.c.l.b16 %v69
    %v109 = vunpack.c.l.b16 %v70
    %v110 = vunpack.c.l.b16 %v71
    %v111 = vunpack.c.l.b16 %v72
    %v112 = vunpack.c.l.b16 %v73
    %v113 = vunpack.c.l.b16 %v74
    %v114 = vunpack.c.l.b16 %v75
    %v115 = vunpack.c.l.b16 %v76
    %v116 = vunpack.c.l.b16 %v77
    %v117 = vunpack.c.l.b16 %v78
    %v118 = vpack.c.b16 %v103, %v102
    %v119 = vpack.c.b16 %v105, %v104
    %v120 = vpack.c.b16 %v107, %v106
    %v121 = vpack.c.b16 %v109, %v108
    %v122 = vpack.c.b16 %v111, %v110
    %v123 = vpack.c.b16 %v113, %v112
    %v124 = vpack.c.b16 %v115, %v114
    %v125 = vpack.c.b16 %v117, %v116
    %134 = vmatprep.subr.bf16.mxu0 0
    %135 = vmatpush1.bf16.msra.mxu0 %v118
    %136 = vmatprep.subr.bf16.mxu0 0
    %137 = vmatpush1.bf16.msra.mxu0 %v119
    %138 = vmatprep.subr.bf16.mxu0 0
    %139 = vmatpush1.bf16.msra.mxu0 %v120
    %140 = vmatprep.subr.bf16.mxu0 0
    %141 = vmatpush1.bf16.msra.mxu0 %v121
    %142 = vmatprep.subr.bf16.mxu0 0
    %143 = vmatpush1.bf16.msra.mxu0 %v122
    %144 = vmatprep.subr.bf16.mxu0 0
    %145 = vmatpush1.bf16.msra.mxu0 %v123
    %146 = vmatprep.subr.bf16.mxu0 0
    %147 = vmatpush1.bf16.msra.mxu0 %v124
    %148 = vmatprep.subr.bf16.mxu0 0
    %149 = vmatpush1.bf16.msra.mxu0 %v125
    %150 = vmatprep.subr.bf16.mxu0 0
    %151 = vmatpush1.bf16.msra.mxu0 0
    %152 = vmatprep.subr.bf16.mxu0 0
    %153 = vmatpush1.bf16.msra.mxu0 0
    %154 = vmatprep.subr.bf16.mxu0 0
    %155 = vmatpush1.bf16.msra.mxu0 0
    %156 = vmatprep.subr.bf16.mxu0 0
    %157 = vmatpush1.bf16.msra.mxu0 0
    %158 = vmatprep.subr.bf16.mxu0 0
    %159 = vmatpush1.bf16.msra.mxu0 0
    %160 = vmatprep.subr.bf16.mxu0 0
    %161 = vmatpush1.bf16.msra.mxu0 0
    %162 = vmatprep.subr.bf16.mxu0 0
    %163 = vmatpush1.bf16.msra.mxu0 0
    %164 = vmatprep.subr.bf16.mxu0 0
    %165 = vmatpush1.bf16.msra.mxu0 0
    %166 = vmatprep.mubr.bf16.mxu0 0
    %167 = vmatmul.mubr.bf16.gmra.mrb[0].mxu0 %v62
    %v168 = vpop.f32.mrb[0].mxu0
    %v169 = vadd.f32 %v84, %v168
    %v170 = vpop.f32.mrb[0].mxu0
    %v171 = vpop.f32.mrb[0].mxu0
    %v172 = vpop.f32.mrb[0].mxu0
    %173 = vdwg.mxu0
    %v174 = vmax.f32 %v169, 0.0
    %v175 = vpack.c.bf16 %v174, %v174
    %v176 = vld [vmem:[#allocation7] sm:$0xf]
    %v177 = vld [vmem:[#allocation7 + $0x4] sm:$0xf]
    %v178 = vld [vmem:[#allocation7 + $0x8] sm:$0xf]
    %v179 = vld [vmem:[#allocation7 + $0xc] sm:$0xf]
    %v180 = vld [vmem:[#allocation7 + $0x10] sm:$0xf]
    %v181 = vld [vmem:[#allocation7 + $0x14] sm:$0xf]
    %v182 = vld [vmem:[#allocation7 + $0x18] sm:$0xf]
    %v183 = vld [vmem:[#allocation7 + $0x1c] sm:$0xf]
    %v184 = vld [vmem:[#allocation7 + $0x20] sm:$0xf]
    %v185 = vld [vmem:[#allocation7 + $0x24] sm:$0xf]
    %v186 = vld [vmem:[#allocation7 + $0x28] sm:$0xf]
    %v187 = vld [vmem:[#allocation7 + $0x2c] sm:$0xf]
    %v188 = vld [vmem:[#allocation7 + $0x30] sm:$0xf]
    %v189 = vld [vmem:[#allocation7 + $0x34] sm:$0xf]
    %v190 = vld [vmem:[#allocation7 + $0x38] sm:$0xf]
    %v191 = vld [vmem:[#allocation7 + $0x3c] sm:$0xf]
    %v192 = vld [vmem:[%s4] sm:$0x1]
    %v194 = vlaneseq
    %v195 = vshrl.u32 %v194, 7
    %v196 = vsub.s32 0, %v195
    %v197 = vrot.slane %v192, %v196
    %v215 = vunpack.c.l.b16 %v176
    %v216 = vunpack.c.l.b16 %v177
    %v217 = vunpack.c.l.b16 %v178
    %v218 = vunpack.c.l.b16 %v179
    %v219 = vunpack.c.l.b16 %v180
    %v220 = vunpack.c.l.b16 %v181
    %v221 = vunpack.c.l.b16 %v182
    %v222 = vunpack.c.l.b16 %v183
    %v223 = vunpack.c.l.b16 %v184
    %v224 = vunpack.c.l.b16 %v185
    %v225 = vunpack.c.l.b16 %v186
    %v226 = vunpack.c.l.b16 %v187
    %v227 = vunpack.c.l.b16 %v188
    %v228 = vunpack.c.l.b16 %v189
    %v229 = vunpack.c.l.b16 %v190
    %v230 = vunpack.c.l.b16 %v191
    %v231 = vpack.c.b16 %v216, %v215
    %v232 = vpack.c.b16 %v218, %v217
    %v233 = vpack.c.b16 %v220, %v219
    %v234 = vpack.c.b16 %v222, %v221
    %v235 = vpack.c.b16 %v224, %v223
    %v236 = vpack.c.b16 %v226, %v225
    %v237 = vpack.c.b16 %v228, %v227
    %v238 = vpack.c.b16 %v230, %v229
    %247 = vmatprep.subr.bf16.mxu0 0
    %248 = vmatpush1.bf16.msra.mxu0 %v231
    %249 = vmatprep.subr.bf16.mxu0 0
    %250 = vmatpush1.bf16.msra.mxu0 %v232
    %251 = vmatprep.subr.bf16.mxu0 0
    %252 = vmatpush1.bf16.msra.mxu0 %v233
    %253 = vmatprep.subr.bf16.mxu0 0
    %254 = vmatpush1.bf16.msra.mxu0 %v234
    %255 = vmatprep.subr.bf16.mxu0 0
    %256 = vmatpush1.bf16.msra.mxu0 %v235
    %257 = vmatprep.subr.bf16.mxu0 0
    %258 = vmatpush1.bf16.msra.mxu0 %v236
    %259 = vmatprep.subr.bf16.mxu0 0
    %260 = vmatpush1.bf16.msra.mxu0 %v237
    %261 = vmatprep.subr.bf16.mxu0 0
    %262 = vmatpush1.bf16.msra.mxu0 %v238
    %263 = vmatprep.subr.bf16.mxu0 0
    %264 = vmatpush1.bf16.msra.mxu0 0
    %265 = vmatprep.subr.bf16.mxu0 0
    %266 = vmatpush1.bf16.msra.mxu0 0
    %267 = vmatprep.subr.bf16.mxu0 0
    %268 = vmatpush1.bf16.msra.mxu0 0
    %269 = vmatprep.subr.bf16.mxu0 0
    %270 = vmatpush1.bf16.msra.mxu0 0
    %271 = vmatprep.subr.bf16.mxu0 0
    %272 = vmatpush1.bf16.msra.mxu0 0
    %273 = vmatprep.subr.bf16.mxu0 0
    %274 = vmatpush1.bf16.msra.mxu0 0
    %275 = vmatprep.subr.bf16.mxu0 0
    %276 = vmatpush1.bf16.msra.mxu0 0
    %277 = vmatprep.subr.bf16.mxu0 0
    %278 = vmatpush1.bf16.msra.mxu0 0
    %279 = vmatprep.mubr.bf16.mxu0 0
    %280 = vmatmul.mubr.bf16.gmra.mrb[0].mxu0 %v175
    %v281 = vpop.f32.mrb[0].mxu0
    %v282 = vadd.f32 %v197, %v281
    %v283 = vpop.f32.mrb[0].mxu0
    %v284 = vpop.f32.mrb[0].mxu0
    %v285 = vpop.f32.mrb[0].mxu0
    %286 = vdwg.mxu0
    %287 = vst [vmem:[#allocation8] sm:$0xff] %v282
    // Predicated region
    $region34: #{tpu_custom_call.1} parent=1 // pred_check
      _
    $region35: #{tpu_custom_call.1} parent=1 // pred_check_branch
      %289 = sbr.rel (0) target = $region37
    $region36: #{tpu_custom_call.1} parent=1 // pred_region
      %s291 = ssub.s32 128, 128
      %292 = vsyncadd [#allocation4], %s291
      %s294 = sshll.u32 [#allocation8], 4
      %s295 = int_to_ptr.vmem [resolvable:$true] %s294
      %297 = dma.vmem_to_hbm [thread:$0]  %s295, 128, %s5, [#allocation4]
    $region37: #{tpu_custom_call.1} parent=1 // pred_fallthru
      _
    // Predicated region
    $region38: #{tpu_custom_call.1} parent=1 // pred_check
      _
    $region39: #{tpu_custom_call.1} parent=1 // pred_check_branch
      %299 = sbr.rel (0) target = $region41
    $region40: #{tpu_custom_call.1} parent=1 // pred_region
      %300 = dma.done [#allocation4], 128
    $region41: #{tpu_custom_call.1} parent=1 // pred_fallthru
      _
    %301 = vsyncpa [#allocation3], 1
    %302 = vsyncpa [#allocation6], 1
    %303 = vsyncpa [#allocation4], 1

</llo_original>
